<compile_context>
chip_gen: v7x
topology: tpu7x:2x2x1
jax: 0.10.0
libtpu: 0.0.40
codegen_flags: <defaults>
</compile_context>

<pallas_src>
import functools

import jax
import jax.numpy as jnp
from jax.experimental import pallas as pl
from jax.experimental.pallas import tpu as pltpu

LN_EPS = 1e-5
_SQRT_2_OVER_PI = 0.7978845608028654


def _layernorm(x, w, b):
    # Two-pass (centered) statistics: matches PyTorch LayerNorm numerics more
    # closely than the fused E[x^2] - mu^2 form when |mean| >> std.
    mu = jnp.mean(x, axis=-1, keepdims=True)
    xc = x - mu
    var = jnp.mean(xc * xc, axis=-1, keepdims=True)
    return xc * jax.lax.rsqrt(var + LN_EPS) * w + b


def _gelu(x, approximate):
    if approximate:
        # tanh lowers to the EUP (its own VLIW slot) -> frees VALU slots; use
        # when the kernel is VALU-bound (small D).
        return 0.5 * x * (1.0 + jnp.tanh(_SQRT_2_OVER_PI * (x + 0.044715 * x * x * x)))
    # Exact erf form, matching torch.nn.GELU() default (erf is a VALU
    # polynomial; pass approximate_gelu=True to move it to the EUP).
    return 0.5 * x * (1.0 + jax.lax.erf(x * (1.0 / jnp.sqrt(2.0))))


def attention_gating_kernel(
    shared_ref, task_ref,
    ln1_w_ref, ln1_b_ref,
    w1_ref, b1_ref,
    w2_ref, b2_ref,
    wr_ref, br_ref,
    ln2_w_ref, ln2_b_ref,
    out_ref,
    *, approximate_gelu: bool,
):
    x = shared_ref[...].astype(jnp.float32)           # (bm, D)
    t = task_ref[...].astype(jnp.float32)             # (bm, D)

    # --- attention branch: LN -> Linear(D, D//2) -> GELU -> Linear(D//2, D) -> Sigmoid
    xn = _layernorm(x, ln1_w_ref[...], ln1_b_ref[...])
    h = jnp.dot(xn.astype(jnp.bfloat16), w1_ref[...],
                preferred_element_type=jnp.float32) + b1_ref[...]
    h = _gelu(h, approximate_gelu)
    # Dropout(0.2): identity at inference (elided).
    a = jnp.dot(h.astype(jnp.bfloat16), w2_ref[...],
                preferred_element_type=jnp.float32) + b2_ref[...]
    attn = jax.nn.sigmoid(a)

    # --- gating: x*attn + t*(1-attn) == t + attn*(x - t)  (one fewer VPU op)
    gated = t + attn * (x - t)

    # --- residual branch: LayerNorm(Linear(gated))
    r = jnp.dot(gated.astype(jnp.bfloat16), wr_ref[...],
                preferred_element_type=jnp.float32) + br_ref[...]
    rn = _layernorm(r, ln2_w_ref[...], ln2_b_ref[...])

    out_ref[...] = (gated + rn).astype(out_ref.dtype)


def _round_up(x, m):
    return ((x + m - 1) // m) * m


def _tpu_vmem_capacity_bytes():
    try:
        return int(pltpu.get_tpu_info().vmem_capacity_bytes)
    except Exception:
        return 64 << 20      # conservative fallback: v7x per-TensorCore VMEM


def attention_gating_module(shared, task, params, *, block_b=None,
                            approximate_gelu=False):
    """shared, task: (B, D) float32 or bfloat16.  params: dict (see init_params)."""
    B, D = shared.shape
    # The identity-projection branch of the PyTorch module is only a no-op when
    # feature dims already match.
    assert task.shape == (B, D), "shared and task feature dims must match"
    H = D // 2

    vmem_cap = _tpu_vmem_capacity_bytes()
    io_itemsize = jnp.dtype(shared.dtype).itemsize

    # VMEM estimate (honest, no double counting):
    #   weights: bf16 matrices + f32 vectors, double-buffered by the pipeline
    #   io:      shared/task/out row tiles, double-buffered
    #   act:     ~8 (block_b, D) f32 temporaries inside the body
    weight_bytes = 2 * (2 * (D * H + H * D + D * D) + 4 * (6 * D + H))

    def _vmem_needed(bb):
        io_bytes = 2 * 3 * bb * D * io_itemsize
        act_bytes = 8 * bb * D * 4
        return weight_bytes + io_bytes + act_bytes

    if block_b is None:
        headroom = 8 << 20
        budget = max(vmem_cap - headroom, 16 << 20)
        # Larger tiles on 128 MiB parts (v5e/v6e), smaller cap on 64 MiB (v7x).
        cap_rows = 1024 if vmem_cap >= (96 << 20) else 512
        bb = max(min(cap_rows, B), 8)
        while bb > 8 and _vmem_needed(bb) > budget:
            bb //= 2
        # MXU-friendly alignment: multiples of 256 when large, else of 8.
        if bb >= 256:
            bb = (bb // 256) * 256
        else:
            bb = max((bb // 8) * 8, min(B, 8))
        # Keep >= 4 grid steps when the batch allows (>=2 per TC on v7x for
        # megacore sharding, plus work for the software pipeline to overlap).
        if B >= 32 and pl.cdiv(B, bb) < 4:
            bb = max(_round_up(pl.cdiv(B, 4), 8), 8)
        # Avoid a tiny ragged last tile: nudge down to a multiple of 8 that
        # divides B, but never below half the chosen tile.
        if bb > 0 and B % bb:
            start = (bb // 8) * 8
            lo = max(8, ((bb // 2) // 8) * 8)
            for cand in range(start, lo - 1, -8):
                if cand and B % cand == 0:
                    bb = cand
                    break
        block_b = max(min(bb, B), 1)

    grid_b = pl.cdiv(B, block_b)

    # Clamp the scoped-VMEM hint to the chip's physical capacity (minus
    # headroom); never above it (v7x: 64 MiB), never below a useful floor.
    vmem_limit = int(_vmem_needed(block_b)) + (4 << 20)
    vmem_limit = int(min(max(vmem_limit, 16 << 20),
                         max(vmem_cap - (8 << 20), 16 << 20)))

    # bf16 MXU operands: use the copies cached at init; fall back to a cast.
    def _bf16(name):
        cached = params.get(name + "_bf16")
        return cached if cached is not None else params[name].astype(jnp.bfloat16)

    w1, w2, wr = _bf16("w1"), _bf16("w2"), _bf16("wr")

    row_spec = pl.BlockSpec((block_b, D), lambda i: (i, 0))
    # Grid-invariant operands: constant index map -> the pipeline only DMAs
    # them once (block index never changes across steps).
    vec_d = pl.BlockSpec((1, D), lambda i: (0, 0))
    vec_h = pl.BlockSpec((1, H), lambda i: (0, 0))
    mat_dh = pl.BlockSpec((D, H), lambda i: (0, 0))
    mat_hd = pl.BlockSpec((H, D), lambda i: (0, 0))
    mat_dd = pl.BlockSpec((D, D), lambda i: (0, 0))

    grid_spec = pltpu.PrefetchScalarGridSpec(
        num_scalar_prefetch=0,
        grid=(grid_b,),
        in_specs=[
            row_spec, row_spec,            # shared, task
            vec_d, vec_d,                  # ln1 w, b
            mat_dh, vec_h,                 # W1 (D, D//2), b1
            mat_hd, vec_d,                 # W2 (D//2, D), b2
            mat_dd, vec_d,                 # Wr (D, D), br
            vec_d, vec_d,                  # ln2 w, b
        ],
        out_specs=row_spec,
    )

    kernel = functools.partial(attention_gating_kernel,
                               approximate_gelu=approximate_gelu)

    return pl.pallas_call(
        kernel,
        out_shape=jax.ShapeDtypeStruct((B, D), shared.dtype),
        grid_spec=grid_spec,
        compiler_params=pltpu.CompilerParams(
            dimension_semantics=("parallel",),
            vmem_limit_bytes=vmem_limit),
    )(
        shared, task,
        params["ln1_w"], params["ln1_b"],
        w1, params["b1"],
        w2, params["b2"],
        wr, params["br"],
        params["ln2_w"], params["ln2_b"],
    )


def init_params(key, feature_dim):
    """Deterministic synthetic parameters mirroring PyTorch default init.
    Weights stored as (in, out) = transpose of torch's (out, in); bf16 MXU
    copies are cached here so the forward wrapper never re-casts per call."""
    D, H = feature_dim, feature_dim // 2
    ks = jax.random.split(key, 3)

    def lin(k, fan_in, fan_out):
        kw, kb = jax.random.split(k)
        bound = 1.0 / jnp.sqrt(fan_in)
        w = jax.random.uniform(kw, (fan_in, fan_out), jnp.float32, -bound, bound)
        b = jax.random.uniform(kb, (1, fan_out), jnp.float32, -bound, bound)
        return w, b

    w1, b1 = lin(ks[0], D, H)
    w2, b2 = lin(ks[1], H, D)
    wr, br = lin(ks[2], D, D)
    p = {
        "ln1_w": jnp.ones((1, D), jnp.float32),
        "ln1_b": jnp.zeros((1, D), jnp.float32),
        "w1": w1, "b1": b1,
        "w2": w2, "b2": b2,
        "wr": wr, "br": br,
        "ln2_w": jnp.ones((1, D), jnp.float32),
        "ln2_b": jnp.zeros((1, D), jnp.float32),
    }
    for name in ("w1", "w2", "wr"):
        p[name + "_bf16"] = p[name].astype(jnp.bfloat16)
    return p


def reference_forward(shared, task, p, *, approximate_gelu=False):
    """Pure-JAX reference matching the kernel's numerics (bf16 matmul operands,
    f32 accumulation, two-pass LayerNorm)."""
    bf = jnp.bfloat16

    def ln(x, w, b):
        mu = jnp.mean(x, axis=-1, keepdims=True)
        xc = x - mu
        var = jnp.mean(xc * xc, axis=-1, keepdims=True)
        return xc * jax.lax.rsqrt(var + LN_EPS) * w + b

    x = shared.astype(jnp.float32)
    t = task.astype(jnp.float32)
    xn = ln(x, p["ln1_w"], p["ln1_b"])
    h = jnp.dot(xn.astype(bf), p["w1"].astype(bf),
                preferred_element_type=jnp.float32) + p["b1"]
    h = _gelu(h, approximate_gelu)
    a = jnp.dot(h.astype(bf), p["w2"].astype(bf),
                preferred_element_type=jnp.float32) + p["b2"]
    attn = jax.nn.sigmoid(a)
    gated = t + attn * (x - t)
    r = jnp.dot(gated.astype(bf), p["wr"].astype(bf),
                preferred_element_type=jnp.float32) + p["br"]
    return (gated + ln(r, p["ln2_w"], p["ln2_b"])).astype(shared.dtype)


if __name__ == "__main__":
    # Small demo shape: D=128 keeps the feature axis lane-dense; B=64 with an
    # explicit block_b=16 gives a 4-step grid to exercise pipelining and the
    # "parallel" batch axis; the second call exercises the auto tile-sizing.
    B, D = 64, 128

    key = jax.random.PRNGKey(0)
    k_sh, k_ts, k_p = jax.random.split(key, 3)
    shared = jax.random.normal(k_sh, (B, D), jnp.float32)
    task = jax.random.normal(k_ts, (B, D), jnp.float32)
    params = init_params(k_p, D)

    out = jax.block_until_ready(
        attention_gating_module(shared, task, params, block_b=16))
    out_auto = jax.block_until_ready(
        attention_gating_module(shared, task, params))

    ref = reference_forward(shared, task, params)
    assert out.shape == (B, D)
    assert jnp.allclose(out, ref, atol=2e-3, rtol=2e-3), \
        "mismatch vs JAX reference (block_b=16)"
    assert jnp.allclose(out_auto, ref, atol=2e-3, rtol=2e-3), \
        "mismatch vs JAX reference (auto tile)"

    print("KERNEL_OK")
</pallas_src>

<mosaic_0001>
module attributes {stable_mosaic.version = 11 : i64} {
  func.func @attention_gating_kernel(%arg0: i32, %arg1: memref<16x128xf32, #tpu.memory_space<vmem>>, %arg2: memref<16x128xf32, #tpu.memory_space<vmem>>, %arg3: memref<1x128xf32, #tpu.memory_space<vmem>>, %arg4: memref<1x128xf32, #tpu.memory_space<vmem>>, %arg5: memref<128x64xbf16, #tpu.memory_space<vmem>>, %arg6: memref<1x64xf32, #tpu.memory_space<vmem>>, %arg7: memref<64x128xbf16, #tpu.memory_space<vmem>>, %arg8: memref<1x128xf32, #tpu.memory_space<vmem>>, %arg9: memref<128x128xbf16, #tpu.memory_space<vmem>>, %arg10: memref<1x128xf32, #tpu.memory_space<vmem>>, %arg11: memref<1x128xf32, #tpu.memory_space<vmem>>, %arg12: memref<1x128xf32, #tpu.memory_space<vmem>>, %arg13: memref<16x128xf32, #tpu.memory_space<vmem>>) attributes {dimension_semantics = [#tpu.dimension_semantics<parallel>], iteration_bounds = array<i64: 4>, scalar_prefetch = 0 : i64, scratch_operands = 0 : i64, tpu.core_type = #tpu.core_type<tc>, window_params = [{transform_indices = @transform_0, window_bounds = array<i64: 16, 128>}, {transform_indices = @transform_1, window_bounds = array<i64: 16, 128>}, {pipeline_mode = #tpu.pipeline_mode<synchronous>, transform_indices = @transform_2, window_bounds = array<i64: 1, 128>}, {pipeline_mode = #tpu.pipeline_mode<synchronous>, transform_indices = @transform_3, window_bounds = array<i64: 1, 128>}, {pipeline_mode = #tpu.pipeline_mode<synchronous>, transform_indices = @transform_4, window_bounds = array<i64: 128, 64>}, {pipeline_mode = #tpu.pipeline_mode<synchronous>, transform_indices = @transform_5, window_bounds = array<i64: 1, 64>}, {pipeline_mode = #tpu.pipeline_mode<synchronous>, transform_indices = @transform_6, window_bounds = array<i64: 64, 128>}, {pipeline_mode = #tpu.pipeline_mode<synchronous>, transform_indices = @transform_7, window_bounds = array<i64: 1, 128>}, {pipeline_mode = #tpu.pipeline_mode<synchronous>, transform_indices = @transform_8, window_bounds = array<i64: 128, 128>}, {pipeline_mode = #tpu.pipeline_mode<synchronous>, transform_indices = @transform_9, window_bounds = array<i64: 1, 128>}, {pipeline_mode = #tpu.pipeline_mode<synchronous>, transform_indices = @transform_10, window_bounds = array<i64: 1, 128>}, {pipeline_mode = #tpu.pipeline_mode<synchronous>, transform_indices = @transform_11, window_bounds = array<i64: 1, 128>}, {transform_indices = @transform_12, window_bounds = array<i64: 16, 128>}]} {
    %c0 = arith.constant 0 : index
    %c0_0 = arith.constant 0 : index
    %0 = vector.load %arg1[%c0, %c0_0] : memref<16x128xf32, #tpu.memory_space<vmem>>, vector<16x128xf32>
    %c0_1 = arith.constant 0 : index
    %c0_2 = arith.constant 0 : index
    %1 = vector.load %arg2[%c0_1, %c0_2] : memref<16x128xf32, #tpu.memory_space<vmem>>, vector<16x128xf32>
    %c0_3 = arith.constant 0 : index
    %c0_4 = arith.constant 0 : index
    %2 = vector.load %arg3[%c0_3, %c0_4] : memref<1x128xf32, #tpu.memory_space<vmem>>, vector<1x128xf32>
    %c0_5 = arith.constant 0 : index
    %c0_6 = arith.constant 0 : index
    %3 = vector.load %arg4[%c0_5, %c0_6] : memref<1x128xf32, #tpu.memory_space<vmem>>, vector<1x128xf32>
    %cst = arith.constant dense<0.000000e+00> : vector<16xf32>
    %4 = vector.multi_reduction <add>, %0, %cst [1] : vector<16x128xf32> to vector<16xf32>
    %5 = vector.shape_cast %4 : vector<16xf32> to vector<16x1xf32>
    %cst_7 = arith.constant 1.280000e+02 : f32
    %6 = vector.broadcast %cst_7 : f32 to vector<16x1xf32>
    %7 = arith.divf %5, %6 : vector<16x1xf32>
    %8 = vector.broadcast %7 : vector<16x1xf32> to vector<16x128xf32>
    %9 = arith.subf %0, %8 : vector<16x128xf32>
    %10 = arith.mulf %9, %9 : vector<16x128xf32>
    %cst_8 = arith.constant dense<0.000000e+00> : vector<16xf32>
    %11 = vector.multi_reduction <add>, %10, %cst_8 [1] : vector<16x128xf32> to vector<16xf32>
    %12 = vector.shape_cast %11 : vector<16xf32> to vector<16x1xf32>
    %cst_9 = arith.constant 1.280000e+02 : f32
    %13 = vector.broadcast %cst_9 : f32 to vector<16x1xf32>
    %14 = arith.divf %12, %13 : vector<16x1xf32>
    %cst_10 = arith.constant 9.99999974E-6 : f32
    %15 = vector.broadcast %cst_10 : f32 to vector<16x1xf32>
    %16 = arith.addf %14, %15 : vector<16x1xf32>
    %17 = math.rsqrt %16 : vector<16x1xf32>
    %18 = vector.broadcast %17 : vector<16x1xf32> to vector<16x128xf32>
    %19 = arith.mulf %9, %18 : vector<16x128xf32>
    %20 = vector.broadcast %2 : vector<1x128xf32> to vector<16x128xf32>
    %21 = arith.mulf %19, %20 : vector<16x128xf32>
    %22 = vector.broadcast %3 : vector<1x128xf32> to vector<16x128xf32>
    %23 = arith.addf %21, %22 : vector<16x128xf32>
    %24 = arith.truncf %23 : vector<16x128xf32> to vector<16x128xbf16>
    %c0_11 = arith.constant 0 : index
    %c0_12 = arith.constant 0 : index
    %25 = vector.load %arg5[%c0_11, %c0_12] : memref<128x64xbf16, #tpu.memory_space<vmem>>, vector<128x64xbf16>
    %cst_13 = arith.constant dense<0.000000e+00> : vector<16x64xf32>
    %26 = tpu.matmul %24, %25, %cst_13 {dimension_numbers = #tpu.dot_dimension_numbers<[1], [0], [0], [1], [0, 0, 1, 1], [], []>} : vector<16x128xbf16>, vector<128x64xbf16>, vector<16x64xf32> -> vector<16x64xf32>
    %c0_14 = arith.constant 0 : index
    %c0_15 = arith.constant 0 : index
    %27 = vector.load %arg6[%c0_14, %c0_15] : memref<1x64xf32, #tpu.memory_space<vmem>>, vector<1x64xf32>
    %28 = vector.broadcast %27 : vector<1x64xf32> to vector<16x64xf32>
    %29 = arith.addf %26, %28 : vector<16x64xf32>
    %cst_16 = arith.constant 5.000000e-01 : f32
    %30 = vector.broadcast %cst_16 : f32 to vector<16x64xf32>
    %31 = arith.mulf %30, %29 : vector<16x64xf32>
    %cst_17 = arith.constant 2.000000e+00 : f32
    %32 = math.sqrt %cst_17 : f32
    %cst_18 = arith.constant 1.000000e+00 : f32
    %33 = arith.divf %cst_18, %32 : f32
    %34 = vector.broadcast %33 : f32 to vector<16x64xf32>
    %35 = arith.mulf %29, %34 : vector<16x64xf32>
    %36 = math.erf %35 : vector<16x64xf32>
    %cst_19 = arith.constant 1.000000e+00 : f32
    %37 = vector.broadcast %cst_19 : f32 to vector<16x64xf32>
    %38 = arith.addf %37, %36 : vector<16x64xf32>
    %39 = arith.mulf %31, %38 : vector<16x64xf32>
    %40 = arith.truncf %39 : vector<16x64xf32> to vector<16x64xbf16>
    %c0_20 = arith.constant 0 : index
    %c0_21 = arith.constant 0 : index
    %41 = vector.load %arg7[%c0_20, %c0_21] : memref<64x128xbf16, #tpu.memory_space<vmem>>, vector<64x128xbf16>
    %cst_22 = arith.constant dense<0.000000e+00> : vector<16x128xf32>
    %42 = tpu.matmul %40, %41, %cst_22 {dimension_numbers = #tpu.dot_dimension_numbers<[1], [0], [0], [1], [0, 0, 1, 1], [], []>} : vector<16x64xbf16>, vector<64x128xbf16>, vector<16x128xf32> -> vector<16x128xf32>
    %c0_23 = arith.constant 0 : index
    %c0_24 = arith.constant 0 : index
    %43 = vector.load %arg8[%c0_23, %c0_24] : memref<1x128xf32, #tpu.memory_space<vmem>>, vector<1x128xf32>
    %44 = vector.broadcast %43 : vector<1x128xf32> to vector<16x128xf32>
    %45 = arith.addf %42, %44 : vector<16x128xf32>
    %46 = arith.negf %45 : vector<16x128xf32>
    %47 = math.exp %46 : vector<16x128xf32>
    %cst_25 = arith.constant 1.000000e+00 : f32
    %48 = vector.broadcast %cst_25 : f32 to vector<16x128xf32>
    %49 = arith.addf %48, %47 : vector<16x128xf32>
    %50 = arith.divf %48, %49 : vector<16x128xf32>
    %51 = arith.subf %0, %1 : vector<16x128xf32>
    %52 = arith.mulf %50, %51 : vector<16x128xf32>
    %53 = arith.addf %1, %52 : vector<16x128xf32>
    %54 = arith.truncf %53 : vector<16x128xf32> to vector<16x128xbf16>
    %c0_26 = arith.constant 0 : index
    %c0_27 = arith.constant 0 : index
    %55 = vector.load %arg9[%c0_26, %c0_27] : memref<128x128xbf16, #tpu.memory_space<vmem>>, vector<128x128xbf16>
    %cst_28 = arith.constant dense<0.000000e+00> : vector<16x128xf32>
    %56 = tpu.matmul %54, %55, %cst_28 {dimension_numbers = #tpu.dot_dimension_numbers<[1], [0], [0], [1], [0, 0, 1, 1], [], []>} : vector<16x128xbf16>, vector<128x128xbf16>, vector<16x128xf32> -> vector<16x128xf32>
    %c0_29 = arith.constant 0 : index
    %c0_30 = arith.constant 0 : index
    %57 = vector.load %arg10[%c0_29, %c0_30] : memref<1x128xf32, #tpu.memory_space<vmem>>, vector<1x128xf32>
    %58 = vector.broadcast %57 : vector<1x128xf32> to vector<16x128xf32>
    %59 = arith.addf %56, %58 : vector<16x128xf32>
    %c0_31 = arith.constant 0 : index
    %c0_32 = arith.constant 0 : index
    %60 = vector.load %arg11[%c0_31, %c0_32] : memref<1x128xf32, #tpu.memory_space<vmem>>, vector<1x128xf32>
    %c0_33 = arith.constant 0 : index
    %c0_34 = arith.constant 0 : index
    %61 = vector.load %arg12[%c0_33, %c0_34] : memref<1x128xf32, #tpu.memory_space<vmem>>, vector<1x128xf32>
    %cst_35 = arith.constant dense<0.000000e+00> : vector<16xf32>
    %62 = vector.multi_reduction <add>, %59, %cst_35 [1] : vector<16x128xf32> to vector<16xf32>
    %63 = vector.shape_cast %62 : vector<16xf32> to vector<16x1xf32>
    %cst_36 = arith.constant 1.280000e+02 : f32
    %64 = vector.broadcast %cst_36 : f32 to vector<16x1xf32>
    %65 = arith.divf %63, %64 : vector<16x1xf32>
    %66 = vector.broadcast %65 : vector<16x1xf32> to vector<16x128xf32>
    %67 = arith.subf %59, %66 : vector<16x128xf32>
    %68 = arith.mulf %67, %67 : vector<16x128xf32>
    %cst_37 = arith.constant dense<0.000000e+00> : vector<16xf32>
    %69 = vector.multi_reduction <add>, %68, %cst_37 [1] : vector<16x128xf32> to vector<16xf32>
    %70 = vector.shape_cast %69 : vector<16xf32> to vector<16x1xf32>
    %cst_38 = arith.constant 1.280000e+02 : f32
    %71 = vector.broadcast %cst_38 : f32 to vector<16x1xf32>
    %72 = arith.divf %70, %71 : vector<16x1xf32>
    %cst_39 = arith.constant 9.99999974E-6 : f32
    %73 = vector.broadcast %cst_39 : f32 to vector<16x1xf32>
    %74 = arith.addf %72, %73 : vector<16x1xf32>
    %75 = math.rsqrt %74 : vector<16x1xf32>
    %76 = vector.broadcast %75 : vector<16x1xf32> to vector<16x128xf32>
    %77 = arith.mulf %67, %76 : vector<16x128xf32>
    %78 = vector.broadcast %60 : vector<1x128xf32> to vector<16x128xf32>
    %79 = arith.mulf %77, %78 : vector<16x128xf32>
    %80 = vector.broadcast %61 : vector<1x128xf32> to vector<16x128xf32>
    %81 = arith.addf %79, %80 : vector<16x128xf32>
    %82 = arith.addf %53, %81 : vector<16x128xf32>
    %c0_40 = arith.constant 0 : index
    %c0_41 = arith.constant 0 : index
    %83 = vector.load %arg13[%c0_40, %c0_41] : memref<16x128xf32, #tpu.memory_space<vmem>>, vector<16x128xf32>
    tpu.vector_store %arg13[%c0_40, %c0_41], %82 {strides = array<i32>} : memref<16x128xf32, #tpu.memory_space<vmem>>, vector<16x128xf32>,
    return
  }
  func.func @transform_0(%arg0: i32) -> (i32, i32) {
    %c0_i32 = arith.constant 0 : i32
    %c0_i32_0 = arith.constant 0 : i32
    return %arg0, %c0_i32 : i32, i32
  }
  func.func @transform_1(%arg0: i32) -> (i32, i32) {
    %c0_i32 = arith.constant 0 : i32
    %c0_i32_0 = arith.constant 0 : i32
    return %arg0, %c0_i32 : i32, i32
  }
  func.func @transform_2(%arg0: i32) -> (i32, i32) {
    %c0_i32 = arith.constant 0 : i32
    %c0_i32_0 = arith.constant 0 : i32
    %c0_i32_1 = arith.constant 0 : i32
    return %c0_i32, %c0_i32_0 : i32, i32
  }
  func.func @transform_3(%arg0: i32) -> (i32, i32) {
    %c0_i32 = arith.constant 0 : i32
    %c0_i32_0 = arith.constant 0 : i32
    %c0_i32_1 = arith.constant 0 : i32
    return %c0_i32, %c0_i32_0 : i32, i32
  }
  func.func @transform_4(%arg0: i32) -> (i32, i32) {
    %c0_i32 = arith.constant 0 : i32
    %c0_i32_0 = arith.constant 0 : i32
    %c0_i32_1 = arith.constant 0 : i32
    return %c0_i32, %c0_i32_0 : i32, i32
  }
  func.func @transform_5(%arg0: i32) -> (i32, i32) {
    %c0_i32 = arith.constant 0 : i32
    %c0_i32_0 = arith.constant 0 : i32
    %c0_i32_1 = arith.constant 0 : i32
    return %c0_i32, %c0_i32_0 : i32, i32
  }
  func.func @transform_6(%arg0: i32) -> (i32, i32) {
    %c0_i32 = arith.constant 0 : i32
    %c0_i32_0 = arith.constant 0 : i32
    %c0_i32_1 = arith.constant 0 : i32
    return %c0_i32, %c0_i32_0 : i32, i32
  }
  func.func @transform_7(%arg0: i32) -> (i32, i32) {
    %c0_i32 = arith.constant 0 : i32
    %c0_i32_0 = arith.constant 0 : i32
    %c0_i32_1 = arith.constant 0 : i32
    return %c0_i32, %c0_i32_0 : i32, i32
  }
  func.func @transform_8(%arg0: i32) -> (i32, i32) {
    %c0_i32 = arith.constant 0 : i32
    %c0_i32_0 = arith.constant 0 : i32
    %c0_i32_1 = arith.constant 0 : i32
    return %c0_i32, %c0_i32_0 : i32, i32
  }
  func.func @transform_9(%arg0: i32) -> (i32, i32) {
    %c0_i32 = arith.constant 0 : i32
    %c0_i32_0 = arith.constant 0 : i32
    %c0_i32_1 = arith.constant 0 : i32
    return %c0_i32, %c0_i32_0 : i32, i32
  }
  func.func @transform_10(%arg0: i32) -> (i32, i32) {
    %c0_i32 = arith.constant 0 : i32
    %c0_i32_0 = arith.constant 0 : i32
    %c0_i32_1 = arith.constant 0 : i32
    return %c0_i32, %c0_i32_0 : i32, i32
  }
  func.func @transform_11(%arg0: i32) -> (i32, i32) {
    %c0_i32 = arith.constant 0 : i32
    %c0_i32_0 = arith.constant 0 : i32
    %c0_i32_1 = arith.constant 0 : i32
    return %c0_i32, %c0_i32_0 : i32, i32
  }
  func.func @transform_12(%arg0: i32) -> (i32, i32) {
    %c0_i32 = arith.constant 0 : i32
    %c0_i32_0 = arith.constant 0 : i32
    return %arg0, %c0_i32 : i32, i32
  }
}

</mosaic_0001>

<llo_original>
// kernel: tpu_custom_call.1
$region0: #{tpu_custom_call.1}
  #allocation0 [shape = 'u32[]', space=smem, size = 0x4, offset = 0x4, fixed_abs, tag = 'smem constant byte address 0x4 - core index']
  #allocation1 [shape = 'u32[144,128]{1,0:T(1,128)}', space=vmem, size = 0x12000, scoped, tag = 'internal scratch']
  %s0 = inlined_call_operand.vmem [shape: f32[64,128], index: 0, kind: input, shape index: {}]
  %s1 = inlined_call_operand.hbm [shape: f32[64,128], index: 1, kind: input, shape index: {}]
  %s2 = inlined_call_operand.vmem [shape: f32[1,128], index: 2, kind: input, shape index: {}]
  %s3 = inlined_call_operand.vmem [shape: f32[1,128], index: 3, kind: input, shape index: {}]
  %s4 = inlined_call_operand.vmem [shape: bf16[128,64], index: 4, kind: input, shape index: {}]
  %s5 = inlined_call_operand.vmem [shape: f32[1,64], index: 5, kind: input, shape index: {}]
  %s6 = inlined_call_operand.vmem [shape: bf16[64,128], index: 6, kind: input, shape index: {}]
  %s7 = inlined_call_operand.vmem [shape: f32[1,128], index: 7, kind: input, shape index: {}]
  %s8 = inlined_call_operand.hbm [shape: bf16[128,128], index: 8, kind: input, shape index: {}]
  %s9 = inlined_call_operand.vmem [shape: f32[1,128], index: 9, kind: input, shape index: {}]
  %s10 = inlined_call_operand.vmem [shape: f32[1,128], index: 10, kind: input, shape index: {}]
  %s11 = inlined_call_operand.vmem [shape: f32[1,128], index: 11, kind: input, shape index: {}]
  %s12 = inlined_call_operand.hbm [shape: f32[64,128], index: 12, kind: output, shape index: {}]
  %s13 = sld [smem:[#allocation0]]
  $region89: #{tpu_custom_call.1} parent=0
    _
  %s15 = ssub.s32 1, %s13
  %s16 = scalar_select 0, %s15, %s13
  $region1: #{tpu_custom_call.1} parent=0
    #allocation2 [shape = 'u8[16384]{0}', space=vmem, size = 0x4000, scoped, tag = 'input window, operand 1']
    #allocation3 [shape = 's32[2]{0}', space=sflag, size = 0x8, scoped, tag = 'scoped memory for tpu_custom_call.1']
    #allocation4 [shape = 's32[2]{0}', space=sflag, size = 0x8, scoped, tag = 'scoped memory for tpu_custom_call.1']
    #allocation5 [shape = 'u8[32768]{0}', space=vmem, size = 0x8000, scoped, tag = 'input window, operand 8, single buffered']
    #allocation6 [shape = 's32[1]{0}', space=sflag, size = 0x4, scoped, tag = 'scoped memory for tpu_custom_call.1']
    #allocation7 [shape = 'u8[16384]{0}', space=vmem, size = 0x4000, scoped, tag = 'output window, operand 0']
    %17 = vsyncpa [#allocation3], 0
    %s18 = scalar_lea.sflag [#allocation3], 1
    %19 = vsyncpa %s18, 0
    %20 = vsyncpa [#allocation6], 0
    %21 = vsyncpa [#allocation4], 0
    %s22 = scalar_lea.sflag [#allocation4], 1
    %23 = vsyncpa %s22, 0
    loop: start=0, step=1, limit=6
    $region2: #{tpu_custom_call.1} parent=1 // loop_pre_header
      _
    $region3: #{tpu_custom_call.1} parent=1 // loop_header
      %s25 = sphi 0, %s29
      %p26 = scmp.ge.s32.totalorder %s25, 6
      %s35 = sphi 0, %s37
      %s38 = sphi 0, %s35
      %s39 = sphi 0, %s38
      %s55 = sphi 0, %s39
      %s61 = sphi 0, %s63
      %s64 = sphi 0, %s61
      %s65 = sphi 0, %s64
      %s81 = sphi 0, %s65
      %s85 = sphi 0, %s85
      %s87 = sphi 0, %s85
      %s88 = sphi 0, %s87
      %s102 = sphi 0, %s88
      %s106 = sphi 0, %s106
      %s108 = sphi 0, %s106
      %s109 = sphi 0, %s108
      %s123 = sphi 0, %s109
      %s127 = sphi 0, %s127
      %s129 = sphi 0, %s127
      %s130 = sphi 0, %s129
      %s144 = sphi 0, %s130
      %s148 = sphi 0, %s148
      %s150 = sphi 0, %s148
      %s151 = sphi 0, %s150
      %s165 = sphi 0, %s151
      %s169 = sphi 0, %s169
      %s171 = sphi 0, %s169
      %s172 = sphi 0, %s171
      %s186 = sphi 0, %s172
      %s190 = sphi 0, %s190
      %s192 = sphi 0, %s190
      %s193 = sphi 0, %s192
      %s207 = sphi 0, %s193
      %s211 = sphi 0, %s211
      %s213 = sphi 0, %s211
      %s214 = sphi 0, %s213
      %s228 = sphi 0, %s214
      %s232 = sphi 0, %s232
      %s234 = sphi 0, %s232
      %s235 = sphi 0, %s234
      %s249 = sphi 0, %s235
      %s253 = sphi 0, %s253
      %s255 = sphi 0, %s253
      %s256 = sphi 0, %s255
      %s270 = sphi 0, %s256
      %s274 = sphi 0, %s274
      %s276 = sphi 0, %s274
      %s277 = sphi 0, %s276
      %s291 = sphi 0, %s277
      %s297 = sphi 0, %s299
      %s300 = sphi 0, %s297
      %s301 = sphi 0, %s300
      %s317 = sphi 0, %s301
    $region4: #{tpu_custom_call.1} parent=1 // loop_header_branch
      %28 = sbr.rel (%p26) target = $region8
    $region5: #{tpu_custom_call.1} parent=1 // loop_body
      %s30 = ssub.s32 %s25, 1
      %s31 = ssub.s32 %s25, 2
      %s32 = sadd.s32 %s25, 1
      %s33 = ssub.s32 %s25, %s32
      %p34 = scmp.eq.s32.totalorder %s33, 0
      %s36 = sadd.s32 %s35, 1
      %s37 = scalar_select %p34, %s35, %s36
      %p40 = pneg %p34
      %p41 = scmp.eq.s32.totalorder %s25, 3
      %p42 = por %p40, %p41
      %p43 = scmp.ne.s32.totalorder %s35, %s38
      %p44 = scmp.eq.s32.totalorder %s25, 0
      %p45 = por %p43, %p44
      %p46 = scmp.ne.s32.totalorder %s35, %s38
      %p47 = scmp.eq.s32.totalorder %s30, 3
      %p48 = por %p46, %p47
      %p49 = scmp.ne.s32.totalorder %s38, %s39
      %p50 = scmp.eq.s32.totalorder %s30, 0
      %p51 = por %p49, %p50
      %p52 = scmp.ne.s32.totalorder %s38, %s39
      %p53 = scmp.eq.s32.totalorder %s31, 3
      %p54 = por %p52, %p53
      %p56 = scmp.ne.s32.totalorder %s39, %s55
      %p57 = scmp.eq.s32.totalorder %s31, 0
      %p58 = por %p56, %p57
      %s59 = ssub.s32 %s25, %s32
      %p60 = scmp.eq.s32.totalorder %s59, 0
      %s62 = sadd.s32 %s61, 1
      %s63 = scalar_select %p60, %s61, %s62
      %p66 = pneg %p60
      %p67 = scmp.eq.s32.totalorder %s25, 3
      %p68 = por %p66, %p67
      %p69 = scmp.ne.s32.totalorder %s61, %s64
      %p70 = scmp.eq.s32.totalorder %s25, 0
      %p71 = por %p69, %p70
      %p72 = scmp.ne.s32.totalorder %s61, %s64
      %p73 = scmp.eq.s32.totalorder %s30, 3
      %p74 = por %p72, %p73
      %p75 = scmp.ne.s32.totalorder %s64, %s65
      %p76 = scmp.eq.s32.totalorder %s30, 0
      %p77 = por %p75, %p76
      %p78 = scmp.ne.s32.totalorder %s64, %s65
      %p79 = scmp.eq.s32.totalorder %s31, 3
      %p80 = por %p78, %p79
      %p82 = scmp.ne.s32.totalorder %s65, %s81
      %p83 = scmp.eq.s32.totalorder %s31, 0
      %p84 = por %p82, %p83
      %s86 = sadd.s32 %s85, 1
      %p89 = scmp.eq.s32.totalorder %s25, 3
      %p90 = scmp.ne.s32.totalorder %s85, %s87
      %p91 = scmp.eq.s32.totalorder %s25, 0
      %p92 = por %p90, %p91
      %p93 = scmp.ne.s32.totalorder %s85, %s87
      %p94 = scmp.eq.s32.totalorder %s30, 3
      %p95 = por %p93, %p94
      %p96 = scmp.ne.s32.totalorder %s87, %s88
      %p97 = scmp.eq.s32.totalorder %s30, 0
      %p98 = por %p96, %p97
      %p99 = scmp.ne.s32.totalorder %s87, %s88
      %p100 = scmp.eq.s32.totalorder %s31, 3
      %p101 = por %p99, %p100
      %p103 = scmp.ne.s32.totalorder %s88, %s102
      %p104 = scmp.eq.s32.totalorder %s31, 0
      %p105 = por %p103, %p104
      %s107 = sadd.s32 %s106, 1
      %p110 = scmp.eq.s32.totalorder %s25, 3
      %p111 = scmp.ne.s32.totalorder %s106, %s108
      %p112 = scmp.eq.s32.totalorder %s25, 0
      %p113 = por %p111, %p112
      %p114 = scmp.ne.s32.totalorder %s106, %s108
      %p115 = scmp.eq.s32.totalorder %s30, 3
      %p116 = por %p114, %p115
      %p117 = scmp.ne.s32.totalorder %s108, %s109
      %p118 = scmp.eq.s32.totalorder %s30, 0
      %p119 = por %p117, %p118
      %p120 = scmp.ne.s32.totalorder %s108, %s109
      %p121 = scmp.eq.s32.totalorder %s31, 3
      %p122 = por %p120, %p121
      %p124 = scmp.ne.s32.totalorder %s109, %s123
      %p125 = scmp.eq.s32.totalorder %s31, 0
      %p126 = por %p124, %p125
      %s128 = sadd.s32 %s127, 1
      %p131 = scmp.eq.s32.totalorder %s25, 3
      %p132 = scmp.ne.s32.totalorder %s127, %s129
      %p133 = scmp.eq.s32.totalorder %s25, 0
      %p134 = por %p132, %p133
      %p135 = scmp.ne.s32.totalorder %s127, %s129
      %p136 = scmp.eq.s32.totalorder %s30, 3
      %p137 = por %p135, %p136
      %p138 = scmp.ne.s32.totalorder %s129, %s130
      %p139 = scmp.eq.s32.totalorder %s30, 0
      %p140 = por %p138, %p139
      %p141 = scmp.ne.s32.totalorder %s129, %s130
      %p142 = scmp.eq.s32.totalorder %s31, 3
      %p143 = por %p141, %p142
      %p145 = scmp.ne.s32.totalorder %s130, %s144
      %p146 = scmp.eq.s32.totalorder %s31, 0
      %p147 = por %p145, %p146
      %s149 = sadd.s32 %s148, 1
      %p152 = scmp.eq.s32.totalorder %s25, 3
      %p153 = scmp.ne.s32.totalorder %s148, %s150
      %p154 = scmp.eq.s32.totalorder %s25, 0
      %p155 = por %p153, %p154
      %p156 = scmp.ne.s32.totalorder %s148, %s150
      %p157 = scmp.eq.s32.totalorder %s30, 3
      %p158 = por %p156, %p157
      %p159 = scmp.ne.s32.totalorder %s150, %s151
      %p160 = scmp.eq.s32.totalorder %s30, 0
      %p161 = por %p159, %p160
      %p162 = scmp.ne.s32.totalorder %s150, %s151
      %p163 = scmp.eq.s32.totalorder %s31, 3
      %p164 = por %p162, %p163
      %p166 = scmp.ne.s32.totalorder %s151, %s165
      %p167 = scmp.eq.s32.totalorder %s31, 0
      %p168 = por %p166, %p167
      %s170 = sadd.s32 %s169, 1
      %p173 = scmp.eq.s32.totalorder %s25, 3
      %p174 = scmp.ne.s32.totalorder %s169, %s171
      %p175 = scmp.eq.s32.totalorder %s25, 0
      %p176 = por %p174, %p175
      %p177 = scmp.ne.s32.totalorder %s169, %s171
      %p178 = scmp.eq.s32.totalorder %s30, 3
      %p179 = por %p177, %p178
      %p180 = scmp.ne.s32.totalorder %s171, %s172
      %p181 = scmp.eq.s32.totalorder %s30, 0
      %p182 = por %p180, %p181
      %p183 = scmp.ne.s32.totalorder %s171, %s172
      %p184 = scmp.eq.s32.totalorder %s31, 3
      %p185 = por %p183, %p184
      %p187 = scmp.ne.s32.totalorder %s172, %s186
      %p188 = scmp.eq.s32.totalorder %s31, 0
      %p189 = por %p187, %p188
      %s191 = sadd.s32 %s190, 1
      %p194 = scmp.eq.s32.totalorder %s25, 3
      %p195 = scmp.ne.s32.totalorder %s190, %s192
      %p196 = scmp.eq.s32.totalorder %s25, 0
      %p197 = por %p195, %p196
      %p198 = scmp.ne.s32.totalorder %s190, %s192
      %p199 = scmp.eq.s32.totalorder %s30, 3
      %p200 = por %p198, %p199
      %p201 = scmp.ne.s32.totalorder %s192, %s193
      %p202 = scmp.eq.s32.totalorder %s30, 0
      %p203 = por %p201, %p202
      %p204 = scmp.ne.s32.totalorder %s192, %s193
      %p205 = scmp.eq.s32.totalorder %s31, 3
      %p206 = por %p204, %p205
      %p208 = scmp.ne.s32.totalorder %s193, %s207
      %p209 = scmp.eq.s32.totalorder %s31, 0
      %p210 = por %p208, %p209
      %s212 = sadd.s32 %s211, 1
      %p215 = scmp.eq.s32.totalorder %s25, 3
      %p216 = scmp.ne.s32.totalorder %s211, %s213
      %p217 = scmp.eq.s32.totalorder %s25, 0
      %p218 = por %p216, %p217
      %p219 = scmp.ne.s32.totalorder %s211, %s213
      %p220 = scmp.eq.s32.totalorder %s30, 3
      %p221 = por %p219, %p220
      %p222 = scmp.ne.s32.totalorder %s213, %s214
      %p223 = scmp.eq.s32.totalorder %s30, 0
      %p224 = por %p222, %p223
      %p225 = scmp.ne.s32.totalorder %s213, %s214
      %p226 = scmp.eq.s32.totalorder %s31, 3
      %p227 = por %p225, %p226
      %p229 = scmp.ne.s32.totalorder %s214, %s228
      %p230 = scmp.eq.s32.totalorder %s31, 0
      %p231 = por %p229, %p230
      %s233 = sadd.s32 %s232, 1
      %p236 = scmp.eq.s32.totalorder %s25, 3
      %p237 = scmp.ne.s32.totalorder %s232, %s234
      %p238 = scmp.eq.s32.totalorder %s25, 0
      %p239 = por %p237, %p238
      %p240 = scmp.ne.s32.totalorder %s232, %s234
      %p241 = scmp.eq.s32.totalorder %s30, 3
      %p242 = por %p240, %p241
      %p243 = scmp.ne.s32.totalorder %s234, %s235
      %p244 = scmp.eq.s32.totalorder %s30, 0
      %p245 = por %p243, %p244
      %p246 = scmp.ne.s32.totalorder %s234, %s235
      %p247 = scmp.eq.s32.totalorder %s31, 3
      %p248 = por %p246, %p247
      %p250 = scmp.ne.s32.totalorder %s235, %s249
      %p251 = scmp.eq.s32.totalorder %s31, 0
      %p252 = por %p250, %p251
      %s254 = sadd.s32 %s253, 1
      %p257 = scmp.eq.s32.totalorder %s25, 3
      %p258 = scmp.ne.s32.totalorder %s253, %s255
      %p259 = scmp.eq.s32.totalorder %s25, 0
      %p260 = por %p258, %p259
      %p261 = scmp.ne.s32.totalorder %s253, %s255
      %p262 = scmp.eq.s32.totalorder %s30, 3
      %p263 = por %p261, %p262
      %p264 = scmp.ne.s32.totalorder %s255, %s256
      %p265 = scmp.eq.s32.totalorder %s30, 0
      %p266 = por %p264, %p265
      %p267 = scmp.ne.s32.totalorder %s255, %s256
      %p268 = scmp.eq.s32.totalorder %s31, 3
      %p269 = por %p267, %p268
      %p271 = scmp.ne.s32.totalorder %s256, %s270
      %p272 = scmp.eq.s32.totalorder %s31, 0
      %p273 = por %p271, %p272
      %s275 = sadd.s32 %s274, 1
      %p278 = scmp.eq.s32.totalorder %s25, 3
      %p279 = scmp.ne.s32.totalorder %s274, %s276
      %p280 = scmp.eq.s32.totalorder %s25, 0
      %p281 = por %p279, %p280
      %p282 = scmp.ne.s32.totalorder %s274, %s276
      %p283 = scmp.eq.s32.totalorder %s30, 3
      %p284 = por %p282, %p283
      %p285 = scmp.ne.s32.totalorder %s276, %s277
      %p286 = scmp.eq.s32.totalorder %s30, 0
      %p287 = por %p285, %p286
      %p288 = scmp.ne.s32.totalorder %s276, %s277
      %p289 = scmp.eq.s32.totalorder %s31, 3
      %p290 = por %p288, %p289
      %p292 = scmp.ne.s32.totalorder %s277, %s291
      %p293 = scmp.eq.s32.totalorder %s31, 0
      %p294 = por %p292, %p293
      %s295 = ssub.s32 %s25, %s32
      %p296 = scmp.eq.s32.totalorder %s295, 0
      %s298 = sadd.s32 %s297, 1
      %s299 = scalar_select %p296, %s297, %s298
      %p302 = pneg %p296
      %p303 = scmp.eq.s32.totalorder %s25, 3
      %p304 = por %p302, %p303
      %p305 = scmp.ne.s32.totalorder %s297, %s300
      %p306 = scmp.eq.s32.totalorder %s25, 0
      %p307 = por %p305, %p306
      %p308 = scmp.ne.s32.totalorder %s297, %s300
      %p309 = scmp.eq.s32.totalorder %s30, 3
      %p310 = por %p308, %p309
      %p311 = scmp.ne.s32.totalorder %s300, %s301
      %p312 = scmp.eq.s32.totalorder %s30, 0
      %p313 = por %p311, %p312
      %p314 = scmp.ne.s32.totalorder %s300, %s301
      %p315 = scmp.eq.s32.totalorder %s31, 3
      %p316 = por %p314, %p315
      %p318 = scmp.ne.s32.totalorder %s301, %s317
      %p319 = scmp.eq.s32.totalorder %s31, 0
      %p320 = por %p318, %p319
      %p321 = scmp.le.s32.totalorder 1, %s25
      %p322 = scmp.lt.s32.totalorder %s25, 5
      %p323 = pnand %p321, %p322
      %p324 = pneg %p323
      // Predicated region
      $region9: #{tpu_custom_call.1} parent=5 // pred_check
        _
      $region10: #{tpu_custom_call.1} parent=5 // pred_check_branch
        %326 = sbr.rel (%p323) target = $region12
      $region11: #{tpu_custom_call.1} parent=5 // pred_region
        %s327 = ssub.s32 %s25, 1
        // Predicated region
        $region13: #{tpu_custom_call.1} parent=11 // pred_check
          %p328 = pneg %p98
        $region14: #{tpu_custom_call.1} parent=11 // pred_check_branch
          %330 = sbr.rel (%p328) target = $region16
        $region15: #{tpu_custom_call.1} parent=11 // pred_region
          _
        $region16: #{tpu_custom_call.1} parent=11 // pred_fallthru
          _
        // Predicated region
        $region17: #{tpu_custom_call.1} parent=11 // pred_check
          %p331 = pneg %p119
        $region18: #{tpu_custom_call.1} parent=11 // pred_check_branch
          %333 = sbr.rel (%p331) target = $region20
        $region19: #{tpu_custom_call.1} parent=11 // pred_region
          _
        $region20: #{tpu_custom_call.1} parent=11 // pred_fallthru
          _
        // Predicated region
        $region21: #{tpu_custom_call.1} parent=11 // pred_check
          %p334 = pneg %p140
        $region22: #{tpu_custom_call.1} parent=11 // pred_check_branch
          %336 = sbr.rel (%p334) target = $region24
        $region23: #{tpu_custom_call.1} parent=11 // pred_region
          _
        $region24: #{tpu_custom_call.1} parent=11 // pred_fallthru
          _
        // Predicated region
        $region25: #{tpu_custom_call.1} parent=11 // pred_check
          %p337 = pneg %p161
        $region26: #{tpu_custom_call.1} parent=11 // pred_check_branch
          %339 = sbr.rel (%p337) target = $region28
        $region27: #{tpu_custom_call.1} parent=11 // pred_region
          _
        $region28: #{tpu_custom_call.1} parent=11 // pred_fallthru
          _
        // Predicated region
        $region29: #{tpu_custom_call.1} parent=11 // pred_check
          %p340 = pneg %p182
        $region30: #{tpu_custom_call.1} parent=11 // pred_check_branch
          %342 = sbr.rel (%p340) target = $region32
        $region31: #{tpu_custom_call.1} parent=11 // pred_region
          _
        $region32: #{tpu_custom_call.1} parent=11 // pred_fallthru
          _
        // Predicated region
        $region33: #{tpu_custom_call.1} parent=11 // pred_check
          %p343 = pneg %p203
        $region34: #{tpu_custom_call.1} parent=11 // pred_check_branch
          %345 = sbr.rel (%p343) target = $region36
        $region35: #{tpu_custom_call.1} parent=11 // pred_region
          _
        $region36: #{tpu_custom_call.1} parent=11 // pred_fallthru
          _
        // Predicated region
        $region37: #{tpu_custom_call.1} parent=11 // pred_check
          %p346 = pneg %p224
        $region38: #{tpu_custom_call.1} parent=11 // pred_check_branch
          %348 = sbr.rel (%p346) target = $region40
        $region39: #{tpu_custom_call.1} parent=11 // pred_region
          %s350 = ssub.s32 1024, 1024
          %351 = vsyncadd [#allocation6], %s350
          %s352 = sshll.u32 [#allocation5], 4
          %s353 = int_to_ptr.vmem [resolvable:$true] %s352
          %358 = dma.hbm_to_vmem [thread:$0]  %s8, 1024, %s353, [#allocation6], 64, 64, 4
        $region40: #{tpu_custom_call.1} parent=11 // pred_fallthru
          _
        // Predicated region
        $region41: #{tpu_custom_call.1} parent=11 // pred_check
          %p359 = pneg %p245
        $region42: #{tpu_custom_call.1} parent=11 // pred_check_branch
          %361 = sbr.rel (%p359) target = $region44
        $region43: #{tpu_custom_call.1} parent=11 // pred_region
          _
        $region44: #{tpu_custom_call.1} parent=11 // pred_fallthru
          _
        // Predicated region
        $region45: #{tpu_custom_call.1} parent=11 // pred_check
          %p362 = pneg %p266
        $region46: #{tpu_custom_call.1} parent=11 // pred_check_branch
          %364 = sbr.rel (%p362) target = $region48
        $region47: #{tpu_custom_call.1} parent=11 // pred_region
          _
        $region48: #{tpu_custom_call.1} parent=11 // pred_fallthru
          _
        // Predicated region
        $region49: #{tpu_custom_call.1} parent=11 // pred_check
          %p365 = pneg %p287
        $region50: #{tpu_custom_call.1} parent=11 // pred_check_branch
          %367 = sbr.rel (%p365) target = $region52
        $region51: #{tpu_custom_call.1} parent=11 // pred_region
          _
        $region52: #{tpu_custom_call.1} parent=11 // pred_fallthru
          _
      $region12: #{tpu_custom_call.1} parent=5 // pred_fallthru
        _
      %p368 = scmp.lt.s32.totalorder %s25, 4
      // Predicated region
      $region53: #{tpu_custom_call.1} parent=5 // pred_check
        %p369 = pneg %p368
      $region54: #{tpu_custom_call.1} parent=5 // pred_check_branch
        %371 = sbr.rel (%p369) target = $region56
      $region55: #{tpu_custom_call.1} parent=5 // pred_region
        // Predicated region
        $region57: #{tpu_custom_call.1} parent=55 // pred_check
          %p372 = pneg %p45
        $region58: #{tpu_custom_call.1} parent=55 // pred_check_branch
          %374 = sbr.rel (%p372) target = $region60
        $region59: #{tpu_custom_call.1} parent=55 // pred_region
          %s375 = smul.u32 2, %s25
          %p376 = scmp.lt.s32.totalorder %s375, 7
          %s377 = scalar_select %p376, %s375, 7
          %s378 = smul.addr %s377, 8
          %s379 = scalar_lea.vmem %s0, %s378
          %s380 = smul.u32 2, %s25
        $region60: #{tpu_custom_call.1} parent=55 // pred_fallthru
          _
        // Predicated region
        $region61: #{tpu_custom_call.1} parent=55 // pred_check
          %p381 = pneg %p71
        $region62: #{tpu_custom_call.1} parent=55 // pred_check_branch
          %383 = sbr.rel (%p381) target = $region64
        $region63: #{tpu_custom_call.1} parent=55 // pred_region
          %s384 = sand.u32 %s61, 1
          %s385 = scalar_lea.sflag [#allocation3], %s384
          %s386 = sand.u32 %s61, 1
          %s387 = smul.addr %s386, 16
          %s388 = scalar_lea.vmem [#allocation2], %s387
          %s389 = smul.u32 2, %s25
          %s391 = ssub.s32 256, 256
          %392 = vsyncadd %s385, %s391
          %s393 = smul.addr %s389, 128
          %s394 = scalar_lea.hbm %s1, %s393
          %s395 = sshll.u32 %s388, 4
          %s396 = int_to_ptr.vmem [resolvable:$true] %s395
          %401 = dma.hbm_to_vmem [thread:$0]  %s394, 256, %s396, %s385, 128, 128, 8
        $region64: #{tpu_custom_call.1} parent=55 // pred_fallthru
          _
      $region56: #{tpu_custom_call.1} parent=5 // pred_fallthru
        _
      %p402 = scmp.le.s32.totalorder 1, %s25
      %p403 = scmp.lt.s32.totalorder %s25, 5
      %p404 = pnand %p402, %p403
      %p405 = pneg %p404
      // Predicated region
      $region65: #{tpu_custom_call.1} parent=5 // pred_check
        _
      $region66: #{tpu_custom_call.1} parent=5 // pred_check_branch
        %407 = sbr.rel (%p404) target = $region68
      $region67: #{tpu_custom_call.1} parent=5 // pred_region
        %s408 = ssub.s32 %s25, 1
        %s409 = sand.u32 %s64, 1
        %s410 = scalar_lea.sflag [#allocation3], %s409
        %s411 = sand.u32 %s64, 1
        %s412 = smul.addr %s411, 16
        %s413 = scalar_lea.vmem [#allocation2], %s412
        // Predicated region
        $region69: #{tpu_custom_call.1} parent=67 // pred_check
          %p414 = pneg %p77
        $region70: #{tpu_custom_call.1} parent=67 // pred_check_branch
          %416 = sbr.rel (%p414) target = $region72
        $region71: #{tpu_custom_call.1} parent=67 // pred_region
          %417 = dma.done %s410, 256
        $region72: #{tpu_custom_call.1} parent=67 // pred_fallthru
          _
        // Predicated region
        $region73: #{tpu_custom_call.1} parent=67 // pred_check
          %p418 = pneg %p224
        $region74: #{tpu_custom_call.1} parent=67 // pred_check_branch
          %420 = sbr.rel (%p418) target = $region76
        $region75: #{tpu_custom_call.1} parent=67 // pred_region
          %421 = dma.done [#allocation6], 1024
        $region76: #{tpu_custom_call.1} parent=67 // pred_fallthru
          _
        %s422 = smul.u32 2, %s30
        %p423 = scmp.lt.s32.totalorder %s422, 7
        %s424 = scalar_select %p423, %s422, 7
        %s425 = smul.addr %s424, 8
        %s426 = scalar_lea.vmem %s0, %s425
        %p427 = pneg %p51
        %p428 = pneg %p48
        %s429 = sand.u32 %s64, 1
        %s430 = scalar_lea.sflag [#allocation3], %s429
        %s431 = sand.u32 %s64, 1
        %s432 = smul.addr %s431, 16
        %s433 = scalar_lea.vmem [#allocation2], %s432
        %p434 = pneg %p77
        %p435 = pneg %p74
        %p436 = pneg %p98
        %p437 = pneg %p95
        %p438 = pneg %p119
        %p439 = pneg %p116
        %p440 = pneg %p140
        %p441 = pneg %p137
        %p442 = pneg %p161
        %p443 = pneg %p158
        %p444 = pneg %p182
        %p445 = pneg %p179
        %p446 = pneg %p203
        %p447 = pneg %p200
        %p448 = pneg %p224
        %p449 = pneg %p221
        %p450 = pneg %p245
        %p451 = pneg %p242
        %p452 = pneg %p266
        %p453 = pneg %p263
        %p454 = pneg %p287
        %p455 = pneg %p284
        %p456 = pneg %p313
        %p457 = pneg %p310
        %s458 = sand.u32 %s300, 1
        %s459 = scalar_lea.sflag [#allocation4], %s458
        %s460 = sand.u32 %s300, 1
        %s461 = smul.addr %s460, 16
        %s462 = scalar_lea.vmem [#allocation7], %s461
        %s463 = smul.u32 2, %s30
        %p464 = scmp.lt.s32.totalorder %s463, 7
        %s465 = scalar_select %p464, %s463, 7
        %s466 = smul.addr %s465, 8
        %s467 = scalar_lea.vmem %s0, %s466
        %s468 = smul.u32 2, %s30
        %s469 = smul.u32 2, %s30
        %s470 = smul.u32 2, %s30
        %v472 = vld [vmem:[%s467] sm:$0xff]
        %v473 = vld [vmem:[%s467 + $0x8] sm:$0xff]
        %v474 = vld [vmem:[%s413] sm:$0xff]
        %v475 = vld [vmem:[%s413 + $0x8] sm:$0xff]
        %v476 = vld [vmem:[%s2] sm:$0x1]
        %v477 = vld [vmem:[%s3] sm:$0x1]
        %478 = vadd.xlane.f32.xlu0 %v472
        %v479 = vpop.xlane.xlu0 %478
        %480 = vadd.xlane.f32.xlu0 %v473
        %v481 = vpop.xlane.xlu0 %480
        %v482 = vrcp.pop 128.0
        %v483 = vmul.f32 %v479, %v482
        %v484 = vmul.f32 %v481, %v482
        %v485 = vsub.f32 %v472, %v483
        %v486 = vsub.f32 %v473, %v484
        %v487 = vmul.f32 %v485, %v485
        %v488 = vmul.f32 %v486, %v486
        %489 = vadd.xlane.f32.xlu0 %v487
        %v490 = vpop.xlane.xlu0 %489
        %491 = vadd.xlane.f32.xlu0 %v488
        %v492 = vpop.xlane.xlu0 %491
        %v493 = vmul.f32 %v490, %v482
        %v494 = vmul.f32 %v492, %v482
        %v495 = vadd.f32 %v493, 1e-05
        %v496 = vadd.f32 %v494, 1e-05
        %v497 = vrsqrt.pop %v495
        %v498 = vrsqrt.pop %v496
        %v499 = vmul.f32 %v485, %v497
        %v500 = vmul.f32 %v486, %v498
        %v502 = vlaneseq
        %v503 = vshrl.u32 %v502, 7
        %v504 = vsub.s32 0, %v503
        %v505 = vrot.slane %v476, %v504
        %v507 = vmul.f32 %v499, %v505
        %v508 = vmul.f32 %v500, %v505
        %v510 = vlaneseq
        %v511 = vshrl.u32 %v510, 7
        %v512 = vsub.s32 0, %v511
        %v513 = vrot.slane %v477, %v512
        %v515 = vadd.f32 %v507, %v513
        %v516 = vadd.f32 %v508, %v513
        %v517 = vpack.c.bf16 %v516, %v515
        %v518 = vld [vmem:[%s4] sm:$0xf]
        %v519 = vld [vmem:[%s4 + $0x4] sm:$0xf]
        %v520 = vld [vmem:[%s4 + $0x8] sm:$0xf]
        %v521 = vld [vmem:[%s4 + $0xc] sm:$0xf]
        %v522 = vld [vmem:[%s4 + $0x10] sm:$0xf]
        %v523 = vld [vmem:[%s4 + $0x14] sm:$0xf]
        %v524 = vld [vmem:[%s4 + $0x18] sm:$0xf]
        %v525 = vld [vmem:[%s4 + $0x1c] sm:$0xf]
        %v526 = vld [vmem:[%s4 + $0x20] sm:$0xf]
        %v527 = vld [vmem:[%s4 + $0x24] sm:$0xf]
        %v528 = vld [vmem:[%s4 + $0x28] sm:$0xf]
        %v529 = vld [vmem:[%s4 + $0x2c] sm:$0xf]
        %v530 = vld [vmem:[%s4 + $0x30] sm:$0xf]
        %v531 = vld [vmem:[%s4 + $0x34] sm:$0xf]
        %v532 = vld [vmem:[%s4 + $0x38] sm:$0xf]
        %v533 = vld [vmem:[%s4 + $0x3c] sm:$0xf]
        %v534 = vld [vmem:[%s5] sm:$0x1]
        %v536 = vlaneseq
        %v537 = vshrl.u32 %v536, 7
        %v538 = vsub.s32 0, %v537
        %v539 = vrot.slane %v534, %v538
        %v557 = vunpack.c.l.b16 %v518
        %v558 = vunpack.c.l.b16 %v519
        %v559 = vunpack.c.l.b16 %v520
        %v560 = vunpack.c.l.b16 %v521
        %v561 = vunpack.c.l.b16 %v522
        %v562 = vunpack.c.l.b16 %v523
        %v563 = vunpack.c.l.b16 %v524
        %v564 = vunpack.c.l.b16 %v525
        %v565 = vunpack.c.l.b16 %v526
        %v566 = vunpack.c.l.b16 %v527
        %v567 = vunpack.c.l.b16 %v528
        %v568 = vunpack.c.l.b16 %v529
        %v569 = vunpack.c.l.b16 %v530
        %v570 = vunpack.c.l.b16 %v531
        %v571 = vunpack.c.l.b16 %v532
        %v572 = vunpack.c.l.b16 %v533
        %v573 = vpack.c.b16 %v558, %v557
        %v574 = vpack.c.b16 %v560, %v559
        %v575 = vpack.c.b16 %v562, %v561
        %v576 = vpack.c.b16 %v564, %v563
        %v577 = vpack.c.b16 %v566, %v565
        %v578 = vpack.c.b16 %v568, %v567
        %v579 = vpack.c.b16 %v570, %v569
        %v580 = vpack.c.b16 %v572, %v571
        %589 = vmatprep.subr.bf16.mxu0 0
        %590 = vmatpush1.bf16.msra.mxu0 %v573
        %591 = vmatprep.subr.bf16.mxu0 0
        %592 = vmatpush1.bf16.msra.mxu0 %v574
        %593 = vmatprep.subr.bf16.mxu0 0
        %594 = vmatpush1.bf16.msra.mxu0 %v575
        %595 = vmatprep.subr.bf16.mxu0 0
        %596 = vmatpush1.bf16.msra.mxu0 %v576
        %597 = vmatprep.subr.bf16.mxu0 0
        %598 = vmatpush1.bf16.msra.mxu0 %v577
        %599 = vmatprep.subr.bf16.mxu0 0
        %600 = vmatpush1.bf16.msra.mxu0 %v578
        %601 = vmatprep.subr.bf16.mxu0 0
        %602 = vmatpush1.bf16.msra.mxu0 %v579
        %603 = vmatprep.subr.bf16.mxu0 0
        %604 = vmatpush1.bf16.msra.mxu0 %v580
        %605 = vmatprep.subr.bf16.mxu0 0
        %606 = vmatpush1.bf16.msra.mxu0 0
        %607 = vmatprep.subr.bf16.mxu0 0
        %608 = vmatpush1.bf16.msra.mxu0 0
        %609 = vmatprep.subr.bf16.mxu0 0
        %610 = vmatpush1.bf16.msra.mxu0 0
        %611 = vmatprep.subr.bf16.mxu0 0
        %612 = vmatpush1.bf16.msra.mxu0 0
        %613 = vmatprep.subr.bf16.mxu0 0
        %614 = vmatpush1.bf16.msra.mxu0 0
        %615 = vmatprep.subr.bf16.mxu0 0
        %616 = vmatpush1.bf16.msra.mxu0 0
        %617 = vmatprep.subr.bf16.mxu0 0
        %618 = vmatpush1.bf16.msra.mxu0 0
        %619 = vmatprep.subr.bf16.mxu0 0
        %620 = vmatpush1.bf16.msra.mxu0 0
        %621 = vmatprep.mubr.bf16.mxu0 0
        %622 = vmatmul.mubr.bf16.gmra.mrb[0].mxu0 %v517
        %v623 = vpop.f32.mrb[0].mxu0
        %v624 = vadd.f32 %v539, %v623
        %v625 = vpop.f32.mrb[0].mxu0
        %v626 = vpop.f32.mrb[0].mxu0
        %v627 = vadd.f32 %v539, %v626
        %v628 = vpop.f32.mrb[0].mxu0
        %629 = vdwg.mxu0
        %v630 = vmul.f32 %v624, 0.5
        %v631 = vmul.f32 %v627, 0.5
        %v632 = vmul.f32 %v624, 0.70710677
        %v633 = vmul.f32 %v627, 0.70710677
        %v634 = verf.f32.pop %v632
        %v635 = verf.f32.pop %v633
        %v636 = vadd.f32 %v634, 1.0
        %v637 = vadd.f32 %v635, 1.0
        %v638 = vmul.f32 %v630, %v636
        %v639 = vmul.f32 %v631, %v637
        %v640 = vpack.c.bf16 %v639, %v638
        %v641 = vld [vmem:[%s6] sm:$0xf]
        %v642 = vld [vmem:[%s6 + $0x4] sm:$0xf]
        %v643 = vld [vmem:[%s6 + $0x8] sm:$0xf]
        %v644 = vld [vmem:[%s6 + $0xc] sm:$0xf]
        %v645 = vld [vmem:[%s6 + $0x10] sm:$0xf]
        %v646 = vld [vmem:[%s6 + $0x14] sm:$0xf]
        %v647 = vld [vmem:[%s6 + $0x18] sm:$0xf]
        %v648 = vld [vmem:[%s6 + $0x1c] sm:$0xf]
        %v649 = vld [vmem:[%s7] sm:$0x1]
        %v651 = vlaneseq
        %v652 = vshrl.u32 %v651, 7
        %v653 = vsub.s32 0, %v652
        %v654 = vrot.slane %v649, %v653
        %v664 = vunpack.c.l.b16 %v641
        %v665 = vunpack.c.l.b16 %v642
        %v666 = vunpack.c.l.b16 %v643
        %v667 = vunpack.c.l.b16 %v644
        %v668 = vunpack.c.l.b16 %v645
        %v669 = vunpack.c.l.b16 %v646
        %v670 = vunpack.c.l.b16 %v647
        %v671 = vunpack.c.l.b16 %v648
        %v672 = vpack.c.b16 %v665, %v664
        %v673 = vpack.c.b16 %v667, %v666
        %v674 = vpack.c.b16 %v669, %v668
        %v675 = vpack.c.b16 %v671, %v670
        %vm680 = vcmask 523264
        %v682 = vsel %vm680, %v640, 0
        %684 = vmatprep.subr.bf16.mxu0 0
        %685 = vmatpush1.bf16.msra.mxu0 %v672
        %686 = vmatprep.subr.bf16.mxu0 0
        %687 = vmatpush1.bf16.msra.mxu0 %v673
        %688 = vmatprep.subr.bf16.mxu0 0
        %689 = vmatpush1.bf16.msra.mxu0 %v674
        %690 = vmatprep.subr.bf16.mxu0 0
        %691 = vmatpush1.bf16.msra.mxu0 %v675
        %692 = vmatprep.subr.bf16.mxu0 0
        %693 = vmatpush1.bf16.msra.mxu0 0
        %694 = vmatprep.subr.bf16.mxu0 0
        %695 = vmatpush1.bf16.msra.mxu0 0
        %696 = vmatprep.subr.bf16.mxu0 0
        %697 = vmatpush1.bf16.msra.mxu0 0
        %698 = vmatprep.subr.bf16.mxu0 0
        %699 = vmatpush1.bf16.msra.mxu0 0
        %700 = vmatprep.subr.bf16.mxu0 0
        %701 = vmatpush1.bf16.msra.mxu0 0
        %702 = vmatprep.subr.bf16.mxu0 0
        %703 = vmatpush1.bf16.msra.mxu0 0
        %704 = vmatprep.subr.bf16.mxu0 0
        %705 = vmatpush1.bf16.msra.mxu0 0
        %706 = vmatprep.subr.bf16.mxu0 0
        %707 = vmatpush1.bf16.msra.mxu0 0
        %708 = vmatprep.subr.bf16.mxu0 0
        %709 = vmatpush1.bf16.msra.mxu0 0
        %710 = vmatprep.subr.bf16.mxu0 0
        %711 = vmatpush1.bf16.msra.mxu0 0
        %712 = vmatprep.subr.bf16.mxu0 0
        %713 = vmatpush1.bf16.msra.mxu0 0
        %714 = vmatprep.subr.bf16.mxu0 0
        %715 = vmatpush1.bf16.msra.mxu0 0
        %716 = vmatprep.mubr.bf16.mxu0 0
        %717 = vmatmul.mubr.bf16.gmra.mrb[0].mxu0 %v682
        %v718 = vpop.f32.mrb[0].mxu0
        %v719 = vadd.f32 %v654, %v718
        %v720 = vpop.f32.mrb[0].mxu0
        %v721 = vpop.f32.mrb[0].mxu0
        %v722 = vadd.f32 %v654, %v721
        %v723 = vpop.f32.mrb[0].mxu0
        %724 = vdwg.mxu0
        %v725 = vxor.u32 %v719, 2147483648
        %v726 = vxor.u32 %v722, 2147483648
        %v727 = vmul.f32 %v725, 1.442695
        %v728 = vpow.pop %v727
        %v729 = vmul.f32 %v726, 1.442695
        %v730 = vpow.pop %v729
        %v731 = vadd.f32 %v728, 1.0
        %v732 = vadd.f32 %v730, 1.0
        %v733 = vrcp.pop %v731
        %v734 = vmul.f32 1.0, %v733
        %v735 = vrcp.pop %v732
        %v736 = vmul.f32 1.0, %v735
        %v737 = vsub.f32 %v472, %v474
        %v738 = vsub.f32 %v473, %v475
        %v739 = vmul.f32 %v734, %v737
        %v740 = vmul.f32 %v736, %v738
        %v741 = vadd.f32 %v474, %v739
        %v742 = vadd.f32 %v475, %v740
        %v743 = vpack.c.bf16 %v742, %v741
        %v744 = vld [vmem:[#allocation5] sm:$0xf]
        %v745 = vld [vmem:[#allocation5 + $0x4] sm:$0xf]
        %v746 = vld [vmem:[#allocation5 + $0x8] sm:$0xf]
        %v747 = vld [vmem:[#allocation5 + $0xc] sm:$0xf]
        %v748 = vld [vmem:[#allocation5 + $0x10] sm:$0xf]
        %v749 = vld [vmem:[#allocation5 + $0x14] sm:$0xf]
        %v750 = vld [vmem:[#allocation5 + $0x18] sm:$0xf]
        %v751 = vld [vmem:[#allocation5 + $0x1c] sm:$0xf]
        %v752 = vld [vmem:[#allocation5 + $0x20] sm:$0xf]
        %v753 = vld [vmem:[#allocation5 + $0x24] sm:$0xf]
        %v754 = vld [vmem:[#allocation5 + $0x28] sm:$0xf]
        %v755 = vld [vmem:[#allocation5 + $0x2c] sm:$0xf]
        %v756 = vld [vmem:[#allocation5 + $0x30] sm:$0xf]
        %v757 = vld [vmem:[#allocation5 + $0x34] sm:$0xf]
        %v758 = vld [vmem:[#allocation5 + $0x38] sm:$0xf]
        %v759 = vld [vmem:[#allocation5 + $0x3c] sm:$0xf]
        %v760 = vld [vmem:[%s9] sm:$0x1]
        %v762 = vlaneseq
        %v763 = vshrl.u32 %v762, 7
        %v764 = vsub.s32 0, %v763
        %v765 = vrot.slane %v760, %v764
        %v783 = vunpack.c.l.b16 %v744
        %v784 = vunpack.c.l.b16 %v745
        %v785 = vunpack.c.l.b16 %v746
        %v786 = vunpack.c.l.b16 %v747
        %v787 = vunpack.c.l.b16 %v748
        %v788 = vunpack.c.l.b16 %v749
        %v789 = vunpack.c.l.b16 %v750
        %v790 = vunpack.c.l.b16 %v751
        %v791 = vunpack.c.l.b16 %v752
        %v792 = vunpack.c.l.b16 %v753
        %v793 = vunpack.c.l.b16 %v754
        %v794 = vunpack.c.l.b16 %v755
        %v795 = vunpack.c.l.b16 %v756
        %v796 = vunpack.c.l.b16 %v757
        %v797 = vunpack.c.l.b16 %v758
        %v798 = vunpack.c.l.b16 %v759
        %v799 = vpack.c.b16 %v784, %v783
        %v800 = vpack.c.b16 %v786, %v785
        %v801 = vpack.c.b16 %v788, %v787
        %v802 = vpack.c.b16 %v790, %v789
        %v803 = vpack.c.b16 %v792, %v791
        %v804 = vpack.c.b16 %v794, %v793
        %v805 = vpack.c.b16 %v796, %v795
        %v806 = vpack.c.b16 %v798, %v797
        %815 = vmatprep.subr.bf16.mxu0 0
        %816 = vmatpush1.bf16.msra.mxu0 %v799
        %817 = vmatprep.subr.bf16.mxu0 0
        %818 = vmatpush1.bf16.msra.mxu0 %v800
        %819 = vmatprep.subr.bf16.mxu0 0
        %820 = vmatpush1.bf16.msra.mxu0 %v801
        %821 = vmatprep.subr.bf16.mxu0 0
        %822 = vmatpush1.bf16.msra.mxu0 %v802
        %823 = vmatprep.subr.bf16.mxu0 0
        %824 = vmatpush1.bf16.msra.mxu0 %v803
        %825 = vmatprep.subr.bf16.mxu0 0
        %826 = vmatpush1.bf16.msra.mxu0 %v804
        %827 = vmatprep.subr.bf16.mxu0 0
        %828 = vmatpush1.bf16.msra.mxu0 %v805
        %829 = vmatprep.subr.bf16.mxu0 0
        %830 = vmatpush1.bf16.msra.mxu0 %v806
        %831 = vmatprep.subr.bf16.mxu0 0
        %832 = vmatpush1.bf16.msra.mxu0 0
        %833 = vmatprep.subr.bf16.mxu0 0
        %834 = vmatpush1.bf16.msra.mxu0 0
        %835 = vmatprep.subr.bf16.mxu0 0
        %836 = vmatpush1.bf16.msra.mxu0 0
        %837 = vmatprep.subr.bf16.mxu0 0
        %838 = vmatpush1.bf16.msra.mxu0 0
        %839 = vmatprep.subr.bf16.mxu0 0
        %840 = vmatpush1.bf16.msra.mxu0 0
        %841 = vmatprep.subr.bf16.mxu0 0
        %842 = vmatpush1.bf16.msra.mxu0 0
        %843 = vmatprep.subr.bf16.mxu0 0
        %844 = vmatpush1.bf16.msra.mxu0 0
        %845 = vmatprep.subr.bf16.mxu0 0
        %846 = vmatpush1.bf16.msra.mxu0 0
        %847 = vmatprep.mubr.bf16.mxu0 0
        %848 = vmatmul.mubr.bf16.gmra.mrb[0].mxu0 %v743
        %v849 = vpop.f32.mrb[0].mxu0
        %v850 = vadd.f32 %v765, %v849
        %v851 = vpop.f32.mrb[0].mxu0
        %v852 = vpop.f32.mrb[0].mxu0
        %v853 = vadd.f32 %v765, %v852
        %v854 = vpop.f32.mrb[0].mxu0
        %855 = vdwg.mxu0
        %v856 = vld [vmem:[%s10] sm:$0x1]
        %v857 = vld [vmem:[%s11] sm:$0x1]
        %858 = vadd.xlane.f32.xlu0 %v850
        %v859 = vpop.xlane.xlu0 %858
        %860 = vadd.xlane.f32.xlu0 %v853
        %v861 = vpop.xlane.xlu0 %860
        %v862 = vmul.f32 %v859, %v482
        %v863 = vmul.f32 %v861, %v482
        %v864 = vsub.f32 %v850, %v862
        %v865 = vsub.f32 %v853, %v863
        %v866 = vmul.f32 %v864, %v864
        %v867 = vmul.f32 %v865, %v865
        %868 = vadd.xlane.f32.xlu0 %v866
        %v869 = vpop.xlane.xlu0 %868
        %870 = vadd.xlane.f32.xlu0 %v867
        %v871 = vpop.xlane.xlu0 %870
        %v872 = vmul.f32 %v869, %v482
        %v873 = vmul.f32 %v871, %v482
        %v874 = vadd.f32 %v872, 1e-05
        %v875 = vadd.f32 %v873, 1e-05
        %v876 = vrsqrt.pop %v874
        %v877 = vrsqrt.pop %v875
        %v878 = vmul.f32 %v864, %v876
        %v879 = vmul.f32 %v865, %v877
        %v881 = vlaneseq
        %v882 = vshrl.u32 %v881, 7
        %v883 = vsub.s32 0, %v882
        %v884 = vrot.slane %v856, %v883
        %v886 = vmul.f32 %v878, %v884
        %v887 = vmul.f32 %v879, %v884
        %v889 = vlaneseq
        %v890 = vshrl.u32 %v889, 7
        %v891 = vsub.s32 0, %v890
        %v892 = vrot.slane %v857, %v891
        %v894 = vadd.f32 %v886, %v892
        %v895 = vadd.f32 %v887, %v892
        %v896 = vadd.f32 %v741, %v894
        %v897 = vadd.f32 %v742, %v895
        %898 = vst [vmem:[%s462] sm:$0xff] %v896
        %899 = vst [vmem:[%s462 + $0x8] sm:$0xff] %v897
        %s900 = sand.u32 %s300, 1
        %s901 = scalar_lea.sflag [#allocation4], %s900
        %s902 = sand.u32 %s300, 1
        %s903 = smul.addr %s902, 16
        %s904 = scalar_lea.vmem [#allocation7], %s903
        // Predicated region
        $region77: #{tpu_custom_call.1} parent=67 // pred_check
          %p905 = pneg %p310
        $region78: #{tpu_custom_call.1} parent=67 // pred_check_branch
          %907 = sbr.rel (%p905) target = $region80
        $region79: #{tpu_custom_call.1} parent=67 // pred_region
          %s908 = smul.u32 2, %s30
          %s910 = ssub.s32 256, 256
          %911 = vsyncadd %s901, %s910
          %s912 = smul.addr %s908, 128
          %s913 = scalar_lea.hbm %s12, %s912
          %s914 = sshll.u32 %s904, 4
          %s915 = int_to_ptr.vmem [resolvable:$true] %s914
          %920 = dma.vmem_to_hbm [thread:$0]  %s915, 256, %s913, %s901, 128, 128, 8
        $region80: #{tpu_custom_call.1} parent=67 // pred_fallthru
          _
      $region68: #{tpu_custom_call.1} parent=5 // pred_fallthru
        _
      %p921 = scmp.le.s32.totalorder 2, %s25
      // Predicated region
      $region81: #{tpu_custom_call.1} parent=5 // pred_check
        %p922 = pneg %p921
      $region82: #{tpu_custom_call.1} parent=5 // pred_check_branch
        %924 = sbr.rel (%p922) target = $region84
      $region83: #{tpu_custom_call.1} parent=5 // pred_region
        %s925 = ssub.s32 %s25, 2
        // Predicated region
        $region85: #{tpu_custom_call.1} parent=83 // pred_check
          %p926 = pneg %p316
        $region86: #{tpu_custom_call.1} parent=83 // pred_check_branch
          %928 = sbr.rel (%p926) target = $region88
        $region87: #{tpu_custom_call.1} parent=83 // pred_region
          %s929 = sand.u32 %s301, 1
          %s930 = scalar_lea.sflag [#allocation4], %s929
          %s931 = sand.u32 %s301, 1
          %s932 = smul.addr %s931, 16
          %s933 = scalar_lea.vmem [#allocation7], %s932
          %934 = dma.done %s930, 256
        $region88: #{tpu_custom_call.1} parent=83 // pred_fallthru
          _
      $region84: #{tpu_custom_call.1} parent=5 // pred_fallthru
        _
    $region6: #{tpu_custom_call.1} parent=1 // loop_footer
      %s29 = sadd.s32 1, %s25
    $region7: #{tpu_custom_call.1} parent=1 // loop_footer_branch
      %24 = sbr.rel target = $region3
    $region8: #{tpu_custom_call.1} parent=1 // loop_exit
      _
    %935 = vsyncpa [#allocation3], 1
    %s936 = scalar_lea.sflag [#allocation3], 1
    %937 = vsyncpa %s936, 1
    %938 = vsyncpa [#allocation6], 1
    %939 = vsyncpa [#allocation4], 1
    %s940 = scalar_lea.sflag [#allocation4], 1
    %941 = vsyncpa %s940, 1

</llo_original>
